<compile_context>
chip_gen: v6e
topology: v6e:2x2x1
jax: 0.10.0
libtpu: 0.0.40
codegen_flags: <defaults>
</compile_context>

<pallas_src>
import math
import functools

import jax
import jax.numpy as jnp
from jax.experimental import pallas as pl
from jax.experimental.pallas import tpu as pltpu


# ---------------- pe buffer (same math as the torch __init__) ----------------

def make_positional_encoding(d_model: int, max_length: int = 5000,
                             dtype=jnp.float32) -> jnp.ndarray:
    assert d_model % 2 == 0, "d_model must be even (sin/cos interleave)"
    k = jnp.arange(max_length, dtype=jnp.float32)[:, None]                      # (L, 1)
    div_term = jnp.exp(jnp.arange(0, d_model, 2, dtype=jnp.float32) *
                       (-(math.log(10000.0) / d_model)))                         # (D/2,)
    pe = jnp.zeros((max_length, d_model), dtype=jnp.float32)
    pe = pe.at[:, 0::2].set(jnp.sin(k * div_term))
    pe = pe.at[:, 1::2].set(jnp.cos(k * div_term))
    return pe.astype(dtype)


# ---------------- kernels ----------------

def _posenc_eval_kernel(x_ref, pe_ref, o_ref):
    # x_ref: (B, TILE_C)  pe_ref: (1, TILE_C)  -> sublane-broadcast add, lane-dense store
    o_ref[...] = (x_ref[...] + pe_ref[...]).astype(o_ref.dtype)


def _posenc_train_kernel(x_ref, pe_ref, bits_ref, o_ref, *, threshold, scale):
    y = x_ref[...] + pe_ref[...]
    # keep w.p. (1-p): integer threshold compare on raw uint32 bits (no f32 convert)
    keep = bits_ref[...] >= jnp.uint32(threshold)
    mult = jnp.where(keep, jnp.asarray(scale, y.dtype), jnp.asarray(0.0, y.dtype))
    o_ref[...] = (y * mult).astype(o_ref.dtype)


# ---------------- tiling helper ----------------

def _pick_col_tile(n_cols: int, n_rows: int, itemsize: int,
                   cap_bytes: int = 2 << 20) -> int:
    """Largest multiple-of-128 divisor of n_cols with n_rows*tile*itemsize <= cap.

    If n_cols is not a multiple of 128, fall back to a single full-extent block
    (BlockSpec allows last dim == full array dim)."""
    if n_cols % 128 != 0:
        return n_cols
    max_cols = max(128, cap_bytes // max(1, n_rows * itemsize))
    max_cols = min(n_cols, (max_cols // 128) * 128)
    for t in range(max_cols, 127, -128):
        if n_cols % t == 0:
            return t
    return n_cols


# ---------------- wrapper ----------------

def positional_encoding_forward(x, pe_full, *, dropout_p: float = 0.1,
                                training: bool = False, rng_key=None):
    B, S, D = x.shape
    SD = S * D

    # lane-dense 2D view; pe cast to the activation dtype (no implicit f32 promote)
    xf = x.reshape(B, SD)
    pe = pe_full[:S].astype(x.dtype).reshape(1, SD)

    itemsize = jnp.dtype(x.dtype).itemsize
    tile_c = _pick_col_tile(SD, B, itemsize)
    grid = (SD // tile_c,)

    row_spec = pl.BlockSpec((B, tile_c), lambda j: (0, j))
    pe_spec = pl.BlockSpec((1, tile_c), lambda j: (0, j))

    # ~6 double-buffered blocks live at once (train path), each capped at ~2 MiB
    # -> well under v5e's 16 MiB default scoped VMEM and far under this limit.
    cparams = pltpu.CompilerParams(
        dimension_semantics=("parallel",),
        vmem_limit_bytes=32 * 1024 * 1024,
    )

    if (not training) or dropout_p == 0.0:
        out = pl.pallas_call(
            _posenc_eval_kernel,
            out_shape=jax.ShapeDtypeStruct((B, SD), x.dtype),
            grid=grid,
            in_specs=[row_spec, pe_spec],
            out_specs=row_spec,
            compiler_params=cparams,
        )(xf, pe)
        return out.reshape(B, S, D)

    assert 0.0 < dropout_p < 1.0, "dropout_p must be in [0, 1)"
    assert rng_key is not None, "training-mode dropout needs rng_key"

    bits = jax.random.bits(rng_key, (B, SD), dtype=jnp.uint32)
    threshold = min(int(round(dropout_p * (2.0 ** 32))), 2 ** 32 - 1)
    scale = 1.0 / (1.0 - dropout_p)

    out = pl.pallas_call(
        functools.partial(_posenc_train_kernel, threshold=threshold, scale=scale),
        out_shape=jax.ShapeDtypeStruct((B, SD), x.dtype),
        grid=grid,
        in_specs=[row_spec, pe_spec, row_spec],
        out_specs=row_spec,
        compiler_params=cparams,
    )(xf, pe, bits)
    return out.reshape(B, S, D)


# ---------------- test ----------------

if __name__ == "__main__":
    # small shapes consistent with the module: batch=2, seq=8, d_model=32
    B, S, D = 2, 8, 32
    max_length = 64
    dropout_p = 0.1

    key = jax.random.PRNGKey(0)
    kx, kdrop = jax.random.split(key)
    x = jax.random.normal(kx, (B, S, D), dtype=jnp.float32)
    pe_full = make_positional_encoding(D, max_length, dtype=x.dtype)  # (max_length, D)

    ref = x + pe_full[:S][None, :, :]

    # eval mode (dropout = identity): deterministic check against reference
    out_eval = jax.block_until_ready(
        positional_encoding_forward(x, pe_full, dropout_p=dropout_p, training=False))
    assert out_eval.shape == (B, S, D)
    assert jnp.allclose(out_eval, ref, atol=1e-6, rtol=1e-6), "eval mismatch"

    # training mode: inverted dropout — kept elements equal ref/(1-p), dropped are 0
    out_train = jax.block_until_ready(
        positional_encoding_forward(x, pe_full, dropout_p=dropout_p,
                                    training=True, rng_key=kdrop))
    assert out_train.shape == (B, S, D)
    scale = 1.0 / (1.0 - dropout_p)
    kept = out_train != 0
    assert jnp.allclose(jnp.where(kept, out_train, 0.0),
                        jnp.where(kept, ref * scale, 0.0),
                        atol=1e-5, rtol=1e-5), "train kept-value mismatch"

    print("KERNEL_OK")
</pallas_src>

<mosaic_0001>
module attributes {stable_mosaic.version = 11 : i64} {
  func.func @_posenc_eval_kernel(%arg0: i32, %arg1: memref<2x256xf32, #tpu.memory_space<vmem>>, %arg2: memref<1x256xf32, #tpu.memory_space<vmem>>, %arg3: memref<2x256xf32, #tpu.memory_space<vmem>>) attributes {dimension_semantics = [#tpu.dimension_semantics<parallel>], iteration_bounds = array<i64: 1>, scalar_prefetch = 0 : i64, scratch_operands = 0 : i64, tpu.core_type = #tpu.core_type<tc>, window_params = [{transform_indices = @transform_0, window_bounds = array<i64: 2, 256>}, {transform_indices = @transform_1, window_bounds = array<i64: 1, 256>}, {transform_indices = @transform_2, window_bounds = array<i64: 2, 256>}]} {
    %c0 = arith.constant 0 : index
    %c0_0 = arith.constant 0 : index
    %0 = vector.load %arg1[%c0, %c0_0] : memref<2x256xf32, #tpu.memory_space<vmem>>, vector<2x256xf32>
    %c0_1 = arith.constant 0 : index
    %c0_2 = arith.constant 0 : index
    %1 = vector.load %arg2[%c0_1, %c0_2] : memref<1x256xf32, #tpu.memory_space<vmem>>, vector<1x256xf32>
    %2 = vector.broadcast %1 : vector<1x256xf32> to vector<2x256xf32>
    %3 = arith.addf %0, %2 : vector<2x256xf32>
    %c0_3 = arith.constant 0 : index
    %c0_4 = arith.constant 0 : index
    %4 = vector.load %arg3[%c0_3, %c0_4] : memref<2x256xf32, #tpu.memory_space<vmem>>, vector<2x256xf32>
    tpu.vector_store %arg3[%c0_3, %c0_4], %3 {strides = array<i32>} : memref<2x256xf32, #tpu.memory_space<vmem>>, vector<2x256xf32>,
    return
  }
  func.func @transform_0(%arg0: i32) -> (i32, i32) {
    %c0_i32 = arith.constant 0 : i32
    %c0_i32_0 = arith.constant 0 : i32
    return %c0_i32, %arg0 : i32, i32
  }
  func.func @transform_1(%arg0: i32) -> (i32, i32) {
    %c0_i32 = arith.constant 0 : i32
    %c0_i32_0 = arith.constant 0 : i32
    return %c0_i32, %arg0 : i32, i32
  }
  func.func @transform_2(%arg0: i32) -> (i32, i32) {
    %c0_i32 = arith.constant 0 : i32
    %c0_i32_0 = arith.constant 0 : i32
    return %c0_i32, %arg0 : i32, i32
  }
}

</mosaic_0001>

<llo_original>
// kernel: tpu_custom_call.1
$region0: #{tpu_custom_call.1}
  #allocation0 [shape = 'u32[]', space=smem, size = 0x4, offset = 0x4, fixed_abs, tag = 'smem constant byte address 0x4 - core index']
  #allocation1 [shape = 'u32[144,128]{1,0:T(1,128)}', space=vmem, size = 0x12000, scoped, tag = 'internal scratch']
  %s0 = inlined_call_operand.hbm [shape: f32[2,256], index: 0, kind: input, shape index: {}]
  %s1 = inlined_call_operand.hbm [shape: f32[1,256], index: 1, kind: input, shape index: {}]
  %s2 = inlined_call_operand.hbm [shape: f32[2,256], index: 2, kind: output, shape index: {}]
  %s3 = sld [smem:[#allocation0]]
  $region26: #{tpu_custom_call.1} parent=0
    _
  %s5 = ssub.s32 1, %s3
  %s6 = scalar_select 0, %s5, %s3
  $region1: #{tpu_custom_call.1} parent=0
    #allocation2 [shape = 'u8[2048]{0}', space=vmem, size = 0x800, scoped, tag = 'input window, operand 0, single buffered']
    #allocation3 [shape = 's32[1]{0}', space=sflag, size = 0x4, scoped, tag = 'scoped memory for tpu_custom_call.1']
    #allocation4 [shape = 's32[1]{0}', space=sflag, size = 0x4, scoped, tag = 'scoped memory for tpu_custom_call.1']
    #allocation5 [shape = 'u8[1024]{0}', space=vmem, size = 0x400, scoped, tag = 'input window, operand 1, single buffered']
    #allocation6 [shape = 's32[1]{0}', space=sflag, size = 0x4, scoped, tag = 'scoped memory for tpu_custom_call.1']
    #allocation7 [shape = 'u8[2048]{0}', space=vmem, size = 0x800, scoped, tag = 'output window, operand 0, single buffered']
    %7 = vsyncpa [#allocation3], 0
    %8 = vsyncpa [#allocation6], 0
    %9 = vsyncpa [#allocation4], 0
    // Predicated region
    $region2: #{tpu_custom_call.1} parent=1 // pred_check
      _
    $region3: #{tpu_custom_call.1} parent=1 // pred_check_branch
      %11 = sbr.rel (0) target = $region5
    $region4: #{tpu_custom_call.1} parent=1 // pred_region
      %s13 = ssub.s32 64, 64
      %14 = vsyncadd [#allocation3], %s13
      %s16 = sshll.u32 [#allocation2], 4
      %s17 = int_to_ptr.vmem [resolvable:$true] %s16
      %19 = dma.hbm_to_vmem [thread:$0]  %s0, 64, %s17, [#allocation3]
    $region5: #{tpu_custom_call.1} parent=1 // pred_fallthru
      _
    // Predicated region
    $region6: #{tpu_custom_call.1} parent=1 // pred_check
      _
    $region7: #{tpu_custom_call.1} parent=1 // pred_check_branch
      %21 = sbr.rel (0) target = $region9
    $region8: #{tpu_custom_call.1} parent=1 // pred_region
      %s23 = ssub.s32 32, 32
      %24 = vsyncadd [#allocation6], %s23
      %s26 = sshll.u32 [#allocation5], 4
      %s27 = int_to_ptr.vmem [resolvable:$true] %s26
      %29 = dma.hbm_to_vmem [thread:$0]  %s1, 32, %s27, [#allocation6]
    $region9: #{tpu_custom_call.1} parent=1 // pred_fallthru
      _
    // Predicated region
    $region10: #{tpu_custom_call.1} parent=1 // pred_check
      _
    $region11: #{tpu_custom_call.1} parent=1 // pred_check_branch
      %31 = sbr.rel (0) target = $region13
    $region12: #{tpu_custom_call.1} parent=1 // pred_region
      %32 = dma.done [#allocation3], 64
    $region13: #{tpu_custom_call.1} parent=1 // pred_fallthru
      _
    // Predicated region
    $region14: #{tpu_custom_call.1} parent=1 // pred_check
      _
    $region15: #{tpu_custom_call.1} parent=1 // pred_check_branch
      %34 = sbr.rel (0) target = $region17
    $region16: #{tpu_custom_call.1} parent=1 // pred_region
      %35 = dma.done [#allocation6], 32
    $region17: #{tpu_custom_call.1} parent=1 // pred_fallthru
      _
    %v36 = vld [vmem:[#allocation2] sm:$0xf]
    %v37 = vld [vmem:[#allocation5] sm:$0x3]
    %v39 = vlaneseq
    %v40 = vshrl.u32 %v39, 7
    %v41 = vsub.s32 0, %v40
    %v42 = vrot.slane %v37, %v41
    %v43 = vlaneseq
    %v44 = vshrl.u32 %v43, 7
    %v45 = vsub.s32 1, %v44
    %v46 = vrot.slane %v37, %v45
    %v47 = vcombine.low %v42, %v46
    %v49 = vunpack.c.l.s4 1983009808
    %v50 = vunpack.c.0.s8 %v49
    %v51 = vlaneseq
    %v52 = vshrl.u32 %v51, 7
    %v53 = vsub.s32 %v50, %v52
    %v54 = vrot.slane %v47, %v53
    %v56 = vadd.f32 %v36, %v54
    %57 = vst [vmem:[#allocation7] sm:$0xf] %v56
    // Predicated region
    $region18: #{tpu_custom_call.1} parent=1 // pred_check
      _
    $region19: #{tpu_custom_call.1} parent=1 // pred_check_branch
      %59 = sbr.rel (0) target = $region21
    $region20: #{tpu_custom_call.1} parent=1 // pred_region
      %s61 = ssub.s32 64, 64
      %62 = vsyncadd [#allocation4], %s61
      %s64 = sshll.u32 [#allocation7], 4
      %s65 = int_to_ptr.vmem [resolvable:$true] %s64
      %67 = dma.vmem_to_hbm [thread:$0]  %s65, 64, %s2, [#allocation4]
    $region21: #{tpu_custom_call.1} parent=1 // pred_fallthru
      _
    // Predicated region
    $region22: #{tpu_custom_call.1} parent=1 // pred_check
      _
    $region23: #{tpu_custom_call.1} parent=1 // pred_check_branch
      %69 = sbr.rel (0) target = $region25
    $region24: #{tpu_custom_call.1} parent=1 // pred_region
      %70 = dma.done [#allocation4], 64
    $region25: #{tpu_custom_call.1} parent=1 // pred_fallthru
      _
    %71 = vsyncpa [#allocation3], 1
    %72 = vsyncpa [#allocation6], 1
    %73 = vsyncpa [#allocation4], 1

</llo_original>
